<compile_context>
chip_gen: v7x
topology: tpu7x:2x2x1
jax: 0.10.0
libtpu: 0.0.40
codegen_flags: <defaults>
</compile_context>

<pallas_src>
import jax
import jax.numpy as jnp
from jax.experimental import pallas as pl
from jax.experimental.pallas import tpu as pltpu


# ---------------------------------------------------------------------------
# complex64 <-> interleaved-float32 views (zero-copy when the backend allows).
# Probe is lazy (no import-time device work) and runs eagerly even under jit.
# ---------------------------------------------------------------------------
_COMPLEX_BITCAST_OK = None


def _complex_bitcast_ok() -> bool:
    global _COMPLEX_BITCAST_OK
    if _COMPLEX_BITCAST_OK is None:
        try:
            with jax.ensure_compile_time_eval():
                a = jnp.zeros((8,), jnp.complex64)
                b = jax.lax.bitcast_convert_type(a, jnp.float32)      # (8, 2)
                c = jax.lax.bitcast_convert_type(b, jnp.complex64)    # (8,)
                jax.block_until_ready((b, c))
            _COMPLEX_BITCAST_OK = True
        except Exception:
            _COMPLEX_BITCAST_OK = False
    return _COMPLEX_BITCAST_OK


def _complex_to_interleaved(x):
    """complex64 (...,) -> float32 (..., 2) laid out as [real, imag] pairs."""
    if _complex_bitcast_ok():
        return jax.lax.bitcast_convert_type(x, jnp.float32)    # zero-copy view
    # TODO(synk): fallback adds one extra HBM pass (rare environments only).
    return jnp.stack([jnp.real(x), jnp.imag(x)], axis=-1)


def _interleaved_to_complex(xf):
    """float32 (..., 2) [real, imag] pairs -> complex64 (...,)."""
    if _complex_bitcast_ok():
        return jax.lax.bitcast_convert_type(xf, jnp.complex64)  # zero-copy view
    return jax.lax.complex(xf[..., 0], xf[..., 1])


# ---------------------------------------------------------------------------
# Block sizing helpers
# ---------------------------------------------------------------------------
def _hardware_budget():
    """(per-block f32 byte budget, vmem_limit_bytes) per TPU generation."""
    kind = ""
    try:
        kind = jax.devices()[0].device_kind.lower()
    except Exception:
        pass
    if any(g in kind for g in ("v4", "v5", "v6")):
        # 128 MiB physical VMEM: 8 MiB blocks -> 32 MiB double-buffered in+out.
        return 8 * 1024 * 1024, 64 * 1024 * 1024
    # v7x (64 MiB physical VMEM) and unknown devices: conservative settings.
    return 4 * 1024 * 1024, 32 * 1024 * 1024


def _largest_tile(dim: int, align: int, cap: int) -> int:
    """Largest multiple of `align` that divides `dim` and is <= cap.

    Assumes dim % align == 0 (so `align` itself is always a valid answer)."""
    b = max(align, (min(cap, dim) // align) * align)
    while b > align and dim % b != 0:
        b -= align
    return b


# ---------------------------------------------------------------------------
# Kernel
# ---------------------------------------------------------------------------
def _doe_kernel(cs_ref, x_ref, o_ref):
    # x_ref/o_ref: (block_r, block_c) float32, interleaved [r, i, r, i, ...]
    # cs_ref:      (2, block_c) float32:
    #   row 0: [ c0,  c0,  c1,  c1, ...]  (cos, duplicated per pair)
    #   row 1: [-s0, +s0, -s1, +s1, ...]  (sign-folded sin)
    x = x_ref[...]
    cs = cs_ref[...]
    ce = cs[0:1, :]                       # (1, block_c), broadcasts over rows
    se = cs[1:2, :]

    bc = x.shape[-1]
    # Pair-swap (r, i) -> (i, r) along lanes: two XLU rolls + lane-parity select.
    nxt = pltpu.roll(x, bc - 1, 1)        # nxt[:, j] = x[:, (j + 1) % bc]
    prv = pltpu.roll(x, 1, 1)             # prv[:, j] = x[:, (j - 1) % bc]
    lane = jax.lax.broadcasted_iota(jnp.int32, x.shape, 1)
    xswap = jnp.where((lane & 1) == 0, nxt, prv)

    # even lanes: c*r - s*i  (real part);  odd lanes: c*i + s*r  (imag part)
    o_ref[...] = ce * x + se * xswap


# ---------------------------------------------------------------------------
# Wrapper
# ---------------------------------------------------------------------------
def doe_forward(phase_params: jax.Array, x: jax.Array) -> jax.Array:
    """phase_params: (H, W) float32; x: (N, C, H, W) complex64 -> complex64."""
    if x.dtype != jnp.complex64:
        x = x.astype(jnp.complex64)
    N, C, H, W = x.shape
    R = N * C                 # rows of the flattened slab
    Ccols = 2 * H * W         # interleaved float32 columns (lane-dense)

    # Hoisted cos/sin (computed once, not N*C times), packed into one slab.
    p = phase_params.astype(jnp.float32).reshape(-1)          # (H*W,)
    c = jnp.cos(p)
    s = jnp.sin(p)
    cs = jnp.concatenate(
        [jnp.stack([c, c], axis=-1).reshape(1, Ccols),
         jnp.stack([-s, s], axis=-1).reshape(1, Ccols)],
        axis=0)                                               # (2, Ccols)

    # Interleaved float32 view of x, flattened to (N*C, 2*H*W).
    xf = _complex_to_interleaved(x).reshape(R, Ccols)

    block_bytes, vmem_limit = _hardware_budget()
    budget_elems = block_bytes // 4

    # ---- block sizing: prefer full, contiguous rows (phase stays resident) --
    if Ccols % 128 != 0:
        # (8,128) rule forces the full column extent.
        # TODO(synk): very large H*W with H*W % 64 != 0 could exceed the VMEM
        # budget here; would need a masked-tail (cdiv) column grid.
        block_c = Ccols
    elif Ccols <= max(128, budget_elems // 8):
        block_c = Ccols                                       # whole-row blocks
    else:
        block_c = _largest_tile(Ccols, 128, max(128, budget_elems // 8))

    if R % 8 != 0:
        block_r = R
    else:
        block_r = _largest_tile(R, 8, max(8, budget_elems // block_c))

    # Megacore (v7x: 2 TensorCores): expose >= 2 ROW blocks when splittable,
    # keeping DMAs contiguous and work balanced.
    if (R // block_r) < 2 and block_r % 16 == 0:
        block_r //= 2

    assert Ccols % 2 == 0 and block_c % 2 == 0, (
        "interleaved (real, imag) pairs must not straddle a column-block edge")
    assert R % block_r == 0 and Ccols % block_c == 0

    nr = R // block_r
    nc = Ccols // block_c

    if nc == 1:
        # 1-D grid over rows; phase block index is constant -> VMEM-resident.
        grid = (nr,)
        x_spec = pl.BlockSpec((block_r, block_c), lambda i: (i, 0))
        p_spec = pl.BlockSpec((2, block_c), lambda i: (0, 0))
        dims = ("parallel",)
    else:
        grid = (nr, nc)
        x_spec = pl.BlockSpec((block_r, block_c), lambda i, j: (i, j))
        p_spec = pl.BlockSpec((2, block_c), lambda i, j: (0, j))
        dims = ("parallel", "parallel")

    out_f = pl.pallas_call(
        _doe_kernel,
        out_shape=jax.ShapeDtypeStruct((R, Ccols), jnp.float32),
        grid_spec=pltpu.PrefetchScalarGridSpec(
            num_scalar_prefetch=0,
            grid=grid,
            in_specs=[p_spec, x_spec],
            out_specs=x_spec,
        ),
        compiler_params=pltpu.CompilerParams(
            dimension_semantics=dims,
            vmem_limit_bytes=vmem_limit,
        ),
    )(cs, xf)

    return _interleaved_to_complex(out_f.reshape(N, C, H, W, 2))


if __name__ == "__main__":
    key = jax.random.PRNGKey(0)
    k_phase, k_xr, k_xi = jax.random.split(key, 3)

    shape = 16                      # DOE(shape=16) -> phase_params (16, 16)
    N, C, H, W = 2, 4, shape, shape

    phase_params = 2.0 * jnp.pi * jax.random.uniform(
        k_phase, (shape, shape), dtype=jnp.float32
    )
    x = jax.lax.complex(
        jax.random.normal(k_xr, (N, C, H, W), dtype=jnp.float32),
        jax.random.normal(k_xi, (N, C, H, W), dtype=jnp.float32),
    )

    out = doe_forward(phase_params, x)
    out = jax.block_until_ready(out)

    # Pure-JAX reference (same math as torch.exp(1j*phase) * x).
    ref = jnp.exp(1j * phase_params.astype(jnp.complex64)) * x
    assert out.shape == (N, C, H, W) and out.dtype == jnp.complex64
    assert jnp.allclose(out, ref, atol=1e-5, rtol=1e-5)

    print("KERNEL_OK")
</pallas_src>

<mosaic_0001>
module attributes {stable_mosaic.version = 11 : i64} {
  func.func @_doe_kernel(%arg0: i32, %arg1: memref<2x512xf32, #tpu.memory_space<vmem>>, %arg2: memref<8x512xf32, #tpu.memory_space<vmem>>, %arg3: memref<8x512xf32, #tpu.memory_space<vmem>>) attributes {dimension_semantics = [#tpu.dimension_semantics<parallel>], iteration_bounds = array<i64: 1>, scalar_prefetch = 0 : i64, scratch_operands = 0 : i64, tpu.core_type = #tpu.core_type<tc>, window_params = [{pipeline_mode = #tpu.pipeline_mode<synchronous>, transform_indices = @transform_0, window_bounds = array<i64: 2, 512>}, {transform_indices = @transform_1, window_bounds = array<i64: 8, 512>}, {transform_indices = @transform_2, window_bounds = array<i64: 8, 512>}]} {
    %c0 = arith.constant 0 : index
    %c0_0 = arith.constant 0 : index
    %0 = vector.load %arg2[%c0, %c0_0] : memref<8x512xf32, #tpu.memory_space<vmem>>, vector<8x512xf32>
    %c0_1 = arith.constant 0 : index
    %c0_2 = arith.constant 0 : index
    %1 = vector.load %arg1[%c0_1, %c0_2] : memref<2x512xf32, #tpu.memory_space<vmem>>, vector<2x512xf32>
    %2 = vector.extract_strided_slice %1 {offsets = [0, 0], sizes = [1, 512], strides = [1, 1]} : vector<2x512xf32> to vector<1x512xf32>
    %3 = vector.extract_strided_slice %1 {offsets = [1, 0], sizes = [1, 512], strides = [1, 1]} : vector<2x512xf32> to vector<1x512xf32>
    %c511_i32 = arith.constant 511 : i32
    %4 = tpu.dynamic_rotate %0 by %c511_i32 dim 1 : vector<8x512xf32>, i32 -> vector<8x512xf32>
    %c1_i32 = arith.constant 1 : i32
    %5 = tpu.dynamic_rotate %0 by %c1_i32 dim 1 : vector<8x512xf32>, i32 -> vector<8x512xf32>
    %6 = tpu.iota {dimensions = array<i32: 1>} : vector<8x512xi32>
    %c1_i32_3 = arith.constant 1 : i32
    %7 = vector.broadcast %c1_i32_3 : i32 to vector<8x512xi32>
    %8 = arith.andi %6, %7 : vector<8x512xi32>
    %c0_i32 = arith.constant 0 : i32
    %9 = vector.broadcast %c0_i32 : i32 to vector<8x512xi32>
    %10 = arith.cmpi eq, %8, %9 : vector<8x512xi32>
    %11 = arith.select %10, %4, %5 : vector<8x512xi1>, vector<8x512xf32>
    %12 = vector.broadcast %2 : vector<1x512xf32> to vector<8x512xf32>
    %13 = arith.mulf %12, %0 : vector<8x512xf32>
    %14 = vector.broadcast %3 : vector<1x512xf32> to vector<8x512xf32>
    %15 = arith.mulf %14, %11 : vector<8x512xf32>
    %16 = arith.addf %13, %15 : vector<8x512xf32>
    %c0_4 = arith.constant 0 : index
    %c0_5 = arith.constant 0 : index
    %17 = vector.load %arg3[%c0_4, %c0_5] : memref<8x512xf32, #tpu.memory_space<vmem>>, vector<8x512xf32>
    tpu.vector_store %arg3[%c0_4, %c0_5], %16 {strides = array<i32>} : memref<8x512xf32, #tpu.memory_space<vmem>>, vector<8x512xf32>,
    return
  }
  func.func @transform_0(%arg0: i32) -> (i32, i32) {
    %c0_i32 = arith.constant 0 : i32
    %c0_i32_0 = arith.constant 0 : i32
    %c0_i32_1 = arith.constant 0 : i32
    return %c0_i32, %c0_i32_0 : i32, i32
  }
  func.func @transform_1(%arg0: i32) -> (i32, i32) {
    %c0_i32 = arith.constant 0 : i32
    %c0_i32_0 = arith.constant 0 : i32
    return %arg0, %c0_i32 : i32, i32
  }
  func.func @transform_2(%arg0: i32) -> (i32, i32) {
    %c0_i32 = arith.constant 0 : i32
    %c0_i32_0 = arith.constant 0 : i32
    return %arg0, %c0_i32 : i32, i32
  }
}

</mosaic_0001>

<llo_original>
// kernel: tpu_custom_call.1
$region0: #{tpu_custom_call.1}
  #allocation0 [shape = 'u32[]', space=smem, size = 0x4, offset = 0x4, fixed_abs, tag = 'smem constant byte address 0x4 - core index']
  #allocation1 [shape = 'u32[144,128]{1,0:T(1,128)}', space=vmem, size = 0x12000, scoped, tag = 'internal scratch']
  %s0 = inlined_call_operand.hbm [shape: f32[2,512], index: 0, kind: input, shape index: {}]
  %s1 = inlined_call_operand.hbm [shape: f32[8,512], index: 1, kind: input, shape index: {}]
  %s2 = inlined_call_operand.hbm [shape: f32[8,512], index: 2, kind: output, shape index: {}]
  %s3 = sld [smem:[#allocation0]]
  $region26: #{tpu_custom_call.1} parent=0
    _
  %s5 = ssub.s32 1, %s3
  %s6 = scalar_select 0, %s5, %s3
  $region1: #{tpu_custom_call.1} parent=0
    #allocation2 [shape = 'u8[4096]{0}', space=vmem, size = 0x1000, scoped, tag = 'input window, operand 0, single buffered']
    #allocation3 [shape = 's32[1]{0}', space=sflag, size = 0x4, scoped, tag = 'scoped memory for tpu_custom_call.1']
    #allocation4 [shape = 's32[1]{0}', space=sflag, size = 0x4, scoped, tag = 'scoped memory for tpu_custom_call.1']
    #allocation5 [shape = 'u8[16384]{0}', space=vmem, size = 0x4000, scoped, tag = 'input window, operand 1, single buffered']
    #allocation6 [shape = 's32[1]{0}', space=sflag, size = 0x4, scoped, tag = 'scoped memory for tpu_custom_call.1']
    #allocation7 [shape = 'u8[16384]{0}', space=vmem, size = 0x4000, scoped, tag = 'output window, operand 0, single buffered']
    %7 = vsyncpa [#allocation3], 0
    %8 = vsyncpa [#allocation6], 0
    %9 = vsyncpa [#allocation4], 0
    // Predicated region
    $region2: #{tpu_custom_call.1} parent=1 // pred_check
      _
    $region3: #{tpu_custom_call.1} parent=1 // pred_check_branch
      %11 = sbr.rel (0) target = $region5
    $region4: #{tpu_custom_call.1} parent=1 // pred_region
      %s13 = ssub.s32 128, 128
      %14 = vsyncadd [#allocation3], %s13
      %s16 = sshll.u32 [#allocation2], 4
      %s17 = int_to_ptr.vmem [resolvable:$true] %s16
      %19 = dma.hbm_to_vmem [thread:$0]  %s0, 128, %s17, [#allocation3]
    $region5: #{tpu_custom_call.1} parent=1 // pred_fallthru
      _
    // Predicated region
    $region6: #{tpu_custom_call.1} parent=1 // pred_check
      _
    $region7: #{tpu_custom_call.1} parent=1 // pred_check_branch
      %21 = sbr.rel (0) target = $region9
    $region8: #{tpu_custom_call.1} parent=1 // pred_region
      %s23 = ssub.s32 512, 512
      %24 = vsyncadd [#allocation6], %s23
      %s26 = sshll.u32 [#allocation5], 4
      %s27 = int_to_ptr.vmem [resolvable:$true] %s26
      %29 = dma.hbm_to_vmem [thread:$0]  %s1, 512, %s27, [#allocation6]
    $region9: #{tpu_custom_call.1} parent=1 // pred_fallthru
      _
    // Predicated region
    $region10: #{tpu_custom_call.1} parent=1 // pred_check
      _
    $region11: #{tpu_custom_call.1} parent=1 // pred_check_branch
      %31 = sbr.rel (0) target = $region13
    $region12: #{tpu_custom_call.1} parent=1 // pred_region
      %32 = dma.done [#allocation3], 128
    $region13: #{tpu_custom_call.1} parent=1 // pred_fallthru
      _
    // Predicated region
    $region14: #{tpu_custom_call.1} parent=1 // pred_check
      _
    $region15: #{tpu_custom_call.1} parent=1 // pred_check_branch
      %34 = sbr.rel (0) target = $region17
    $region16: #{tpu_custom_call.1} parent=1 // pred_region
      %35 = dma.done [#allocation6], 512
    $region17: #{tpu_custom_call.1} parent=1 // pred_fallthru
      _
    %v36 = vld [vmem:[#allocation5] sm:$0xff]
    %v37 = vld [vmem:[#allocation5 + $0x8] sm:$0xff]
    %v38 = vld [vmem:[#allocation5 + $0x10] sm:$0xff]
    %v39 = vld [vmem:[#allocation5 + $0x18] sm:$0xff]
    %v40 = vld [vmem:[#allocation2] sm:$0xff]
    %41 = vrot.lane.b32.xlu0 %v36, 127
    %v42 = vpop.permute.xlu0 %41
    %43 = vrot.lane.b32.xlu0 %v37, 127
    %v44 = vpop.permute.xlu0 %43
    %45 = vrot.lane.b32.xlu0 %v38, 127
    %v46 = vpop.permute.xlu0 %45
    %47 = vrot.lane.b32.xlu0 %v39, 127
    %v48 = vpop.permute.xlu0 %47
    %v49 = vlaneseq
    %v50 = vand.u32 %v49, 127
    %vm51 = vcmp.lt.s32.totalorder %v50, 127
    %v52 = vsel %vm51, %v46, %v48
    %v53 = vsel %vm51, %v44, %v46
    %v54 = vsel %vm51, %v42, %v44
    %v55 = vsel %vm51, %v48, %v42
    %56 = vrot.lane.b32.xlu0 %v36, 1
    %v57 = vpop.permute.xlu0 %56
    %58 = vrot.lane.b32.xlu0 %v37, 1
    %v59 = vpop.permute.xlu0 %58
    %60 = vrot.lane.b32.xlu0 %v38, 1
    %v61 = vpop.permute.xlu0 %60
    %62 = vrot.lane.b32.xlu0 %v39, 1
    %v63 = vpop.permute.xlu0 %62
    %vm64 = vcmp.lt.s32.totalorder %v50, 1
    %v65 = vsel %vm64, %v61, %v63
    %v66 = vsel %vm64, %v59, %v61
    %v67 = vsel %vm64, %v57, %v59
    %v68 = vsel %vm64, %v63, %v57
    %v69 = vadd.s32 %v50, 128
    %v70 = vadd.s32 %v50, 256
    %v71 = vadd.s32 %v50, 384
    %v72 = vand.u32 %v50, 1
    %v73 = vand.u32 %v69, 1
    %v74 = vand.u32 %v70, 1
    %v75 = vand.u32 %v71, 1
    %vm76 = vcmp.eq.s32.totalorder %v72, 0
    %vm77 = vcmp.eq.s32.totalorder %v73, 0
    %vm78 = vcmp.eq.s32.totalorder %v74, 0
    %vm79 = vcmp.eq.s32.totalorder %v75, 0
    %v80 = vsel %vm76, %v54, %v68
    %v81 = vsel %vm77, %v53, %v67
    %v82 = vsel %vm78, %v52, %v66
    %v83 = vsel %vm79, %v55, %v65
    %v85 = vlaneseq
    %v86 = vshrl.u32 %v85, 7
    %v87 = vsub.s32 0, %v86
    %v88 = vrot.slane %v40, %v87
    %v89 = vlaneseq
    %v90 = vshrl.u32 %v89, 7
    %v91 = vsub.s32 2, %v90
    %v92 = vrot.slane %v40, %v91
    %v93 = vlaneseq
    %v94 = vshrl.u32 %v93, 7
    %v95 = vsub.s32 4, %v94
    %v96 = vrot.slane %v40, %v95
    %v97 = vlaneseq
    %v98 = vshrl.u32 %v97, 7
    %v99 = vsub.s32 6, %v98
    %v100 = vrot.slane %v40, %v99
    %v105 = vlaneseq
    %v106 = vshrl.u32 %v105, 7
    %v107 = vsub.s32 0, %v106
    %v108 = vrot.slane %v88, %v107
    %v109 = vlaneseq
    %v110 = vshrl.u32 %v109, 7
    %v111 = vsub.s32 0, %v110
    %v112 = vrot.slane %v92, %v111
    %v113 = vlaneseq
    %v114 = vshrl.u32 %v113, 7
    %v115 = vsub.s32 0, %v114
    %v116 = vrot.slane %v96, %v115
    %v117 = vlaneseq
    %v118 = vshrl.u32 %v117, 7
    %v119 = vsub.s32 0, %v118
    %v120 = vrot.slane %v100, %v119
    %v121 = vmul.f32 %v108, %v36
    %v122 = vmul.f32 %v112, %v37
    %v123 = vmul.f32 %v116, %v38
    %v124 = vmul.f32 %v120, %v39
    %v125 = vlaneseq
    %v126 = vshrl.u32 %v125, 7
    %v127 = vsub.s32 1, %v126
    %v128 = vrot.slane %v40, %v127
    %v129 = vlaneseq
    %v130 = vshrl.u32 %v129, 7
    %v131 = vsub.s32 3, %v130
    %v132 = vrot.slane %v40, %v131
    %v133 = vlaneseq
    %v134 = vshrl.u32 %v133, 7
    %v135 = vsub.s32 5, %v134
    %v136 = vrot.slane %v40, %v135
    %v137 = vlaneseq
    %v138 = vshrl.u32 %v137, 7
    %v139 = vsub.s32 7, %v138
    %v140 = vrot.slane %v40, %v139
    %v145 = vlaneseq
    %v146 = vshrl.u32 %v145, 7
    %v147 = vsub.s32 1, %v146
    %v148 = vrot.slane %v128, %v147
    %v149 = vlaneseq
    %v150 = vshrl.u32 %v149, 7
    %v151 = vsub.s32 1, %v150
    %v152 = vrot.slane %v132, %v151
    %v153 = vlaneseq
    %v154 = vshrl.u32 %v153, 7
    %v155 = vsub.s32 1, %v154
    %v156 = vrot.slane %v136, %v155
    %v157 = vlaneseq
    %v158 = vshrl.u32 %v157, 7
    %v159 = vsub.s32 1, %v158
    %v160 = vrot.slane %v140, %v159
    %v161 = vmul.f32 %v148, %v80
    %v162 = vmul.f32 %v152, %v81
    %v163 = vmul.f32 %v156, %v82
    %v164 = vmul.f32 %v160, %v83
    %v165 = vadd.f32 %v121, %v161
    %v166 = vadd.f32 %v122, %v162
    %v167 = vadd.f32 %v123, %v163
    %v168 = vadd.f32 %v124, %v164
    %169 = vst [vmem:[#allocation7] sm:$0xff] %v165
    %170 = vst [vmem:[#allocation7 + $0x8] sm:$0xff] %v166
    %171 = vst [vmem:[#allocation7 + $0x10] sm:$0xff] %v167
    %172 = vst [vmem:[#allocation7 + $0x18] sm:$0xff] %v168
    // Predicated region
    $region18: #{tpu_custom_call.1} parent=1 // pred_check
      _
    $region19: #{tpu_custom_call.1} parent=1 // pred_check_branch
      %174 = sbr.rel (0) target = $region21
    $region20: #{tpu_custom_call.1} parent=1 // pred_region
      %s176 = ssub.s32 512, 512
      %177 = vsyncadd [#allocation4], %s176
      %s179 = sshll.u32 [#allocation7], 4
      %s180 = int_to_ptr.vmem [resolvable:$true] %s179
      %182 = dma.vmem_to_hbm [thread:$0]  %s180, 512, %s2, [#allocation4]
    $region21: #{tpu_custom_call.1} parent=1 // pred_fallthru
      _
    // Predicated region
    $region22: #{tpu_custom_call.1} parent=1 // pred_check
      _
    $region23: #{tpu_custom_call.1} parent=1 // pred_check_branch
      %184 = sbr.rel (0) target = $region25
    $region24: #{tpu_custom_call.1} parent=1 // pred_region
      %185 = dma.done [#allocation4], 512
    $region25: #{tpu_custom_call.1} parent=1 // pred_fallthru
      _
    %186 = vsyncpa [#allocation3], 1
    %187 = vsyncpa [#allocation6], 1
    %188 = vsyncpa [#allocation4], 1

</llo_original>
